<compile_context>
chip_gen: v6e
topology: v6e:2x2x1
jax: 0.10.0
libtpu: 0.0.40
codegen_flags: <defaults>
</compile_context>

<pallas_src>
import jax
import jax.numpy as jnp
import numpy as np
from jax.experimental import pallas as pl
from jax.experimental.pallas import tpu as pltpu

NU = 0.28
HIDDEN = 32
MAX_TILE = 16384                 # sweep {16384, 32768}; keep VMEM budget in mind
VMEM_LIMIT_BYTES = 32 * 1024 * 1024


def _cdiv(a, b):
    return -(-a // b)


def _round_up(a, m):
    return _cdiv(a, m) * m


def _pick_tile(HW, B, max_tile):
    """Lane-dense tile (multiple of 128), capped, and >=2 grid steps when possible."""
    hw_lane = _round_up(HW, 128)
    tile = min(_round_up(max_tile, 128), hw_lane)
    # v7x has 2 TensorCores sharded over the 'parallel' grid axes: avoid a
    # 1-step grid when the batch is 1 and the whole image fits in one tile.
    if B * _cdiv(HW, tile) < 2 and hw_lane > 128:
        tile = _round_up(_cdiv(hw_lane, 2), 128)
    return tile


def _strain_kernel(x_ref, w1_ref, b1_ref, wc_ref, bvec_ref, out_ref, st_ref):
    # x_ref  : (2, T)            channel-major pixel tile
    # w1_ref : (HIDDEN, 2)       first-layer weights
    # b1_ref : (HIDDEN, 1)       first-layer bias (broadcast over lanes)
    # wc_ref : (4, 2*HIDDEN)     block-diag(-2*mh_nu_folded, w2)  (hoisted)
    # bvec_ref: (4, 1)           [0, 0, 0, b2]
    # out_ref: (4, T)            rows = [Exx, Eyy, Exy, y]
    # st_ref : (2*HIDDEN, T)     VMEM scratch: rows 0:H = ddt_core, H:2H = t
    X = x_ref[...]                                                   # (2, T)

    # hidden pre-activation via MXU: (H, 2) @ (2, T)
    z = jnp.dot(w1_ref[...], X, preferred_element_type=jnp.float32) + b1_ref[...]
    t = jnp.tanh(z)                                                  # EUP
    st_ref[HIDDEN:, :] = t
    st_ref[0:HIDDEN, :] = t - t * t * t      # tanh''/(-2) = t*(1-t^2); -2 in Wc

    # fused output matmul: (4, 2H) @ (2H, T) -> (4, T); one dense store
    out_ref[...] = (
        jnp.dot(wc_ref[...], st_ref[...], preferred_element_type=jnp.float32)
        + bvec_ref[...]
    )


def strain2d_pallas(x_nchw, w1, b1, w2, b2, *, max_tile=MAX_TILE):
    B, C, H, W = x_nchw.shape
    assert C == 2, "Strain2d requires 2 input channels (x/y coordinate fields)"
    HW = H * W

    tile = _pick_tile(HW, B, max_tile)
    n_tiles = _cdiv(HW, tile)

    # free view: channels on sublanes, pixels lane-dense (no transpose, no pad)
    x3 = x_nchw.reshape(B, 2, HW).astype(jnp.float32)

    # ---- hoisted weight combinations (computed once, outside the grid) ------
    w1f = w1.astype(jnp.float32)                                     # (HIDDEN, 2)
    w2v = jnp.reshape(w2, (-1,)).astype(jnp.float32)                 # (HIDDEN,)
    w10 = w1f[:, 0]
    w11 = w1f[:, 1]
    h00 = w2v * w10 * w10
    h11 = w2v * w11 * w11
    h01 = w2v * w10 * w11
    mh_scaled = -2.0 * jnp.stack(
        [h11 - NU * h00,            # Exx = H11 - nu*H00
         h00 - NU * h11,            # Eyy = H00 - nu*H11
         -(1.0 + NU) * h01],        # Exy = -(1+nu)*H01
        axis=0)                     # (3, HIDDEN); -2 from tanh'' folded in

    zeros3 = jnp.zeros((3, HIDDEN), jnp.float32)
    zeros1 = jnp.zeros((1, HIDDEN), jnp.float32)
    wc = jnp.concatenate(
        [jnp.concatenate([mh_scaled, zeros3], axis=1),
         jnp.concatenate([zeros1, w2v.reshape(1, HIDDEN)], axis=1)],
        axis=0)                                                      # (4, 2H)

    b1c = jnp.reshape(b1, (HIDDEN, 1)).astype(jnp.float32)
    bvec = jnp.concatenate(
        [jnp.zeros((3,), jnp.float32),
         jnp.reshape(b2, (1,)).astype(jnp.float32)]).reshape(4, 1)   # (4, 1)

    grid = (B, n_tiles)

    flops = (2 * 2 * HIDDEN + HIDDEN + 3 * HIDDEN + 2 * 4 * 2 * HIDDEN + 4) * B * HW
    cost = pl.CostEstimate(flops=flops,
                           transcendentals=HIDDEN * B * HW,
                           bytes_accessed=(2 * 4 + 4 * 4) * B * HW)

    out = pl.pallas_call(
        _strain_kernel,
        out_shape=jax.ShapeDtypeStruct((B, 4, HW), jnp.float32),
        grid_spec=pltpu.PrefetchScalarGridSpec(
            num_scalar_prefetch=0,
            grid=grid,
            in_specs=[
                pl.BlockSpec((None, 2, tile), lambda b, i: (b, 0, i)),   # x tile
                pl.BlockSpec((HIDDEN, 2), lambda b, i: (0, 0)),          # W1
                pl.BlockSpec((HIDDEN, 1), lambda b, i: (0, 0)),          # b1
                pl.BlockSpec((4, 2 * HIDDEN), lambda b, i: (0, 0)),      # Wc
                pl.BlockSpec((4, 1), lambda b, i: (0, 0)),               # bias vec
            ],
            out_specs=pl.BlockSpec((None, 4, tile), lambda b, i: (b, 0, i)),
            scratch_shapes=[pltpu.VMEM((2 * HIDDEN, tile), jnp.float32)],
        ),
        compiler_params=pltpu.CompilerParams(
            dimension_semantics=("parallel", "parallel"),
            vmem_limit_bytes=VMEM_LIMIT_BYTES),
        cost_estimate=cost,
    )(x3, w1f, b1c, wc, bvec)

    def to_nchw(row):
        return out[:, row:row + 1, :].reshape(B, 1, H, W)

    return to_nchw(0), to_nchw(1), to_nchw(2), to_nchw(3)


if __name__ == "__main__":
    key = jax.random.PRNGKey(0)
    kx, k1, k2, k3, k4 = jax.random.split(key, 5)

    B, H, W = 2, 16, 16
    x = jax.random.normal(kx, (B, 2, H, W), jnp.float32)

    # deterministic synthetic base_net parameters (1x1-conv MLP: 2 -> 32 -> 1)
    w1 = jax.random.normal(k1, (HIDDEN, 2), jnp.float32) / jnp.sqrt(2.0)
    b1 = jax.random.normal(k2, (HIDDEN,), jnp.float32) * 0.1
    w2 = jax.random.normal(k3, (1, HIDDEN), jnp.float32) / jnp.sqrt(float(HIDDEN))
    b2 = jax.random.normal(k4, (1,), jnp.float32) * 0.1

    outs = strain2d_pallas(x, w1, b1, w2, b2)
    jax.block_until_ready(outs)
    Exx, Eyy, Exy, Y = outs

    # -------- reference: same semantics via jax autodiff (per-pixel Hessian) ----
    w2v = w2.reshape(-1)
    b1v = b1.reshape(-1)
    b2sc = b2.reshape(())

    def pixel_fn(xp):                     # xp: (2,) -> scalar y
        return w2v @ jnp.tanh(w1 @ xp + b1v) + b2sc

    XP = jnp.transpose(x, (0, 2, 3, 1)).reshape(-1, 2)        # (N, 2), order (b,h,w)
    y_ref = jax.vmap(pixel_fn)(XP)                            # (N,)
    Href = jax.vmap(jax.hessian(pixel_fn))(XP)                # (N, 2, 2)

    exx_ref = Href[:, 1, 1] - NU * Href[:, 0, 0]
    eyy_ref = Href[:, 0, 0] - NU * Href[:, 1, 1]
    exy_ref = -(1.0 + NU) * Href[:, 0, 1]

    def to4(v):
        return np.asarray(v).reshape(B, H, W)[:, None, :, :]

    np.testing.assert_allclose(np.asarray(Exx), to4(exx_ref), rtol=1e-3, atol=1e-3)
    np.testing.assert_allclose(np.asarray(Eyy), to4(eyy_ref), rtol=1e-3, atol=1e-3)
    np.testing.assert_allclose(np.asarray(Exy), to4(exy_ref), rtol=1e-3, atol=1e-3)
    np.testing.assert_allclose(np.asarray(Y), to4(y_ref), rtol=1e-3, atol=1e-3)

    assert Exx.shape == (B, 1, H, W) and Y.shape == (B, 1, H, W)
    print("KERNEL_OK")
</pallas_src>

<mosaic_0001>
module attributes {stable_mosaic.version = 11 : i64} {
  func.func @_strain_kernel(%arg0: i32, %arg1: i32, %arg2: memref<1x2x256xf32, #tpu.memory_space<vmem>>, %arg3: memref<32x2xf32, #tpu.memory_space<vmem>>, %arg4: memref<32x1xf32, #tpu.memory_space<vmem>>, %arg5: memref<4x64xf32, #tpu.memory_space<vmem>>, %arg6: memref<4x1xf32, #tpu.memory_space<vmem>>, %arg7: memref<1x4x256xf32, #tpu.memory_space<vmem>>, %arg8: memref<64x256xf32, #tpu.memory_space<vmem>>) attributes {dimension_semantics = [#tpu.dimension_semantics<parallel>, #tpu.dimension_semantics<parallel>], iteration_bounds = array<i64: 2, 1>, scalar_prefetch = 0 : i64, scratch_operands = 1 : i64, tpu.core_type = #tpu.core_type<tc>, window_params = [{transform_indices = @transform_0, window_bounds = array<i64: 1, 2, 256>}, {pipeline_mode = #tpu.pipeline_mode<synchronous>, transform_indices = @transform_1, window_bounds = array<i64: 32, 2>}, {pipeline_mode = #tpu.pipeline_mode<synchronous>, transform_indices = @transform_2, window_bounds = array<i64: 32, 1>}, {pipeline_mode = #tpu.pipeline_mode<synchronous>, transform_indices = @transform_3, window_bounds = array<i64: 4, 64>}, {pipeline_mode = #tpu.pipeline_mode<synchronous>, transform_indices = @transform_4, window_bounds = array<i64: 4, 1>}, {transform_indices = @transform_5, window_bounds = array<i64: 1, 4, 256>}]} {
    %c0 = arith.constant 0 : index
    %c0_0 = arith.constant 0 : index
    %c0_1 = arith.constant 0 : index
    %0 = vector.load %arg2[%c0, %c0_0, %c0_1] : memref<1x2x256xf32, #tpu.memory_space<vmem>>, vector<1x2x256xf32>
    %1 = vector.shape_cast %0 : vector<1x2x256xf32> to vector<2x256xf32>
    %c0_2 = arith.constant 0 : index
    %c0_3 = arith.constant 0 : index
    %2 = vector.load %arg3[%c0_2, %c0_3] : memref<32x2xf32, #tpu.memory_space<vmem>>, vector<32x2xf32>
    %cst = arith.constant dense<0.000000e+00> : vector<32x256xf32>
    %3 = tpu.matmul %2, %1, %cst {dimension_numbers = #tpu.dot_dimension_numbers<[1], [0], [0], [1], [0, 0, 1, 1], [], []>} : vector<32x2xf32>, vector<2x256xf32>, vector<32x256xf32> -> vector<32x256xf32>
    %c0_4 = arith.constant 0 : index
    %c0_5 = arith.constant 0 : index
    %4 = vector.load %arg4[%c0_4, %c0_5] : memref<32x1xf32, #tpu.memory_space<vmem>>, vector<32x1xf32>
    %5 = vector.broadcast %4 : vector<32x1xf32> to vector<32x256xf32>
    %6 = arith.addf %3, %5 : vector<32x256xf32>
    %7 = math.tanh %6 : vector<32x256xf32>
    %c32 = arith.constant 32 : index
    %c0_6 = arith.constant 0 : index
    %8 = vector.load %arg8[%c32, %c0_6] : memref<64x256xf32, #tpu.memory_space<vmem>>, vector<32x256xf32>
    tpu.vector_store %arg8[%c32, %c0_6], %7 {strides = array<i32>} : memref<64x256xf32, #tpu.memory_space<vmem>>, vector<32x256xf32>,
    %9 = arith.mulf %7, %7 : vector<32x256xf32>
    %10 = arith.mulf %9, %7 : vector<32x256xf32>
    %11 = arith.subf %7, %10 : vector<32x256xf32>
    %c0_7 = arith.constant 0 : index
    %c0_8 = arith.constant 0 : index
    %12 = vector.load %arg8[%c0_7, %c0_8] : memref<64x256xf32, #tpu.memory_space<vmem>>, vector<32x256xf32>
    tpu.vector_store %arg8[%c0_7, %c0_8], %11 {strides = array<i32>} : memref<64x256xf32, #tpu.memory_space<vmem>>, vector<32x256xf32>,
    %c0_9 = arith.constant 0 : index
    %c0_10 = arith.constant 0 : index
    %13 = vector.load %arg5[%c0_9, %c0_10] : memref<4x64xf32, #tpu.memory_space<vmem>>, vector<4x64xf32>
    %c0_11 = arith.constant 0 : index
    %c0_12 = arith.constant 0 : index
    %14 = vector.load %arg8[%c0_11, %c0_12] : memref<64x256xf32, #tpu.memory_space<vmem>>, vector<64x256xf32>
    %cst_13 = arith.constant dense<0.000000e+00> : vector<4x256xf32>
    %15 = tpu.matmul %13, %14, %cst_13 {dimension_numbers = #tpu.dot_dimension_numbers<[1], [0], [0], [1], [0, 0, 1, 1], [], []>} : vector<4x64xf32>, vector<64x256xf32>, vector<4x256xf32> -> vector<4x256xf32>
    %c0_14 = arith.constant 0 : index
    %c0_15 = arith.constant 0 : index
    %16 = vector.load %arg6[%c0_14, %c0_15] : memref<4x1xf32, #tpu.memory_space<vmem>>, vector<4x1xf32>
    %17 = vector.broadcast %16 : vector<4x1xf32> to vector<4x256xf32>
    %18 = arith.addf %15, %17 : vector<4x256xf32>
    %c0_16 = arith.constant 0 : index
    %c0_17 = arith.constant 0 : index
    %c0_18 = arith.constant 0 : index
    %19 = vector.load %arg7[%c0_16, %c0_17, %c0_18] : memref<1x4x256xf32, #tpu.memory_space<vmem>>, vector<1x4x256xf32>
    %20 = vector.shape_cast %19 : vector<1x4x256xf32> to vector<4x256xf32>
    %21 = vector.shape_cast %18 : vector<4x256xf32> to vector<1x4x256xf32>
    tpu.vector_store %arg7[%c0_16, %c0_17, %c0_18], %21 {strides = array<i32>} : memref<1x4x256xf32, #tpu.memory_space<vmem>>, vector<1x4x256xf32>,
    return
  }
  func.func @transform_0(%arg0: i32, %arg1: i32) -> (i32, i32, i32) {
    %c0_i32 = arith.constant 0 : i32
    %c0_i32_0 = arith.constant 0 : i32
    return %arg0, %c0_i32, %arg1 : i32, i32, i32
  }
  func.func @transform_1(%arg0: i32, %arg1: i32) -> (i32, i32) {
    %c0_i32 = arith.constant 0 : i32
    %c0_i32_0 = arith.constant 0 : i32
    %c0_i32_1 = arith.constant 0 : i32
    return %c0_i32, %c0_i32_0 : i32, i32
  }
  func.func @transform_2(%arg0: i32, %arg1: i32) -> (i32, i32) {
    %c0_i32 = arith.constant 0 : i32
    %c0_i32_0 = arith.constant 0 : i32
    %c0_i32_1 = arith.constant 0 : i32
    return %c0_i32, %c0_i32_0 : i32, i32
  }
  func.func @transform_3(%arg0: i32, %arg1: i32) -> (i32, i32) {
    %c0_i32 = arith.constant 0 : i32
    %c0_i32_0 = arith.constant 0 : i32
    %c0_i32_1 = arith.constant 0 : i32
    return %c0_i32, %c0_i32_0 : i32, i32
  }
  func.func @transform_4(%arg0: i32, %arg1: i32) -> (i32, i32) {
    %c0_i32 = arith.constant 0 : i32
    %c0_i32_0 = arith.constant 0 : i32
    %c0_i32_1 = arith.constant 0 : i32
    return %c0_i32, %c0_i32_0 : i32, i32
  }
  func.func @transform_5(%arg0: i32, %arg1: i32) -> (i32, i32, i32) {
    %c0_i32 = arith.constant 0 : i32
    %c0_i32_0 = arith.constant 0 : i32
    return %arg0, %c0_i32, %arg1 : i32, i32, i32
  }
}

</mosaic_0001>

<llo_original>
// kernel: tpu_custom_call.1
$region0: #{tpu_custom_call.1}
  #allocation0 [shape = 'u32[]', space=smem, size = 0x4, offset = 0x4, fixed_abs, tag = 'smem constant byte address 0x4 - core index']
  #allocation1 [shape = 'u32[144,128]{1,0:T(1,128)}', space=vmem, size = 0x12000, scoped, tag = 'internal scratch']
  #allocation2 [shape = 'f32[64,256]{1,0:T(8,128)}', space=vmem, size = 0x10000, scoped, tag = 'scratch operand']
  %s0 = inlined_call_operand.vmem [shape: f32[2,2,256], index: 0, kind: input, shape index: {}]
  %s1 = inlined_call_operand.vmem [shape: f32[32,2], index: 1, kind: input, shape index: {}]
  %s2 = inlined_call_operand.vmem [shape: f32[32,1], index: 2, kind: input, shape index: {}]
  %s3 = inlined_call_operand.vmem [shape: f32[4,64], index: 3, kind: input, shape index: {}]
  %s4 = inlined_call_operand.vmem [shape: f32[4,1], index: 4, kind: input, shape index: {}]
  %s5 = inlined_call_operand.hbm [shape: f32[2,4,256], index: 5, kind: output, shape index: {}]
  %s6 = sld [smem:[#allocation0]]
  $region53: #{tpu_custom_call.1} parent=0
    _
  %s8 = ssub.s32 1, %s6
  %s9 = scalar_select 0, %s8, %s6
  $region1: #{tpu_custom_call.1} parent=0
    #allocation3 [shape = 'u8[8192]{0}', space=vmem, size = 0x2000, scoped, tag = 'output window, operand 0']
    #allocation4 [shape = 's32[2]{0}', space=sflag, size = 0x8, scoped, tag = 'scoped memory for tpu_custom_call.1']
    %10 = vsyncpa [#allocation4], 0
    %s11 = scalar_lea.sflag [#allocation4], 1
    %12 = vsyncpa %s11, 0
    loop: start=0, step=1, limit=4
    $region2: #{tpu_custom_call.1} parent=1 // loop_pre_header
      _
    $region3: #{tpu_custom_call.1} parent=1 // loop_header
      %s14 = sphi 0, %s18
      %p15 = scmp.ge.s32.totalorder %s14, 4
      %s21 = sphi 0, %s33
      %s22 = sphi 0, %s29
      %s23 = sphi 0, %s21
      %s24 = sphi 0, %s22
      %s25 = sphi 0, %s23
      %s26 = sphi 0, %s24
      %s38 = sphi 0, %s40
      %s41 = sphi 0, %s38
      %s42 = sphi 0, %s41
      %s58 = sphi 0, %s42
      %s62 = sphi 0, %s62
      %s64 = sphi 0, %s62
      %s65 = sphi 0, %s64
      %s79 = sphi 0, %s65
      %s83 = sphi 0, %s83
      %s85 = sphi 0, %s83
      %s86 = sphi 0, %s85
      %s100 = sphi 0, %s86
      %s104 = sphi 0, %s104
      %s106 = sphi 0, %s104
      %s107 = sphi 0, %s106
      %s121 = sphi 0, %s107
      %s125 = sphi 0, %s125
      %s127 = sphi 0, %s125
      %s128 = sphi 0, %s127
      %s142 = sphi 0, %s128
      %s150 = sphi 0, %s152
      %s153 = sphi 0, %s150
      %s154 = sphi 0, %s153
      %s170 = sphi 0, %s154
    $region4: #{tpu_custom_call.1} parent=1 // loop_header_branch
      %17 = sbr.rel (%p15) target = $region8
    $region5: #{tpu_custom_call.1} parent=1 // loop_body
      %s19 = ssub.s32 %s14, 1
      %s20 = ssub.s32 %s14, 2
      %s27 = sadd.s32 1, %s22
      %p28 = scmp.ge.s32.totalorder %s27, 1
      %s29 = scalar_select %p28, 0, %s27
      %s30 = sadd.s32 1, %s21
      %s31 = scalar_select %p28, %s30, %s21
      %p32 = scmp.ge.s32.totalorder %s31, 2
      %s33 = scalar_select %p32, 0, %s31
      %s34 = ssub.s32 %s21, %s33
      %s35 = ssub.s32 %s22, %s29
      %s36 = sor.u32 %s34, %s35
      %p37 = scmp.eq.s32.totalorder %s36, 0
      %s39 = sadd.s32 %s38, 1
      %s40 = scalar_select %p37, %s38, %s39
      %p43 = pneg %p37
      %p44 = scmp.eq.s32.totalorder %s14, 1
      %p45 = por %p43, %p44
      %p46 = scmp.ne.s32.totalorder %s38, %s41
      %p47 = scmp.eq.s32.totalorder %s14, 0
      %p48 = por %p46, %p47
      %p49 = scmp.ne.s32.totalorder %s38, %s41
      %p50 = scmp.eq.s32.totalorder %s19, 1
      %p51 = por %p49, %p50
      %p52 = scmp.ne.s32.totalorder %s41, %s42
      %p53 = scmp.eq.s32.totalorder %s19, 0
      %p54 = por %p52, %p53
      %p55 = scmp.ne.s32.totalorder %s41, %s42
      %p56 = scmp.eq.s32.totalorder %s20, 1
      %p57 = por %p55, %p56
      %p59 = scmp.ne.s32.totalorder %s42, %s58
      %p60 = scmp.eq.s32.totalorder %s20, 0
      %p61 = por %p59, %p60
      %s63 = sadd.s32 %s62, 1
      %p66 = scmp.eq.s32.totalorder %s14, 1
      %p67 = scmp.ne.s32.totalorder %s62, %s64
      %p68 = scmp.eq.s32.totalorder %s14, 0
      %p69 = por %p67, %p68
      %p70 = scmp.ne.s32.totalorder %s62, %s64
      %p71 = scmp.eq.s32.totalorder %s19, 1
      %p72 = por %p70, %p71
      %p73 = scmp.ne.s32.totalorder %s64, %s65
      %p74 = scmp.eq.s32.totalorder %s19, 0
      %p75 = por %p73, %p74
      %p76 = scmp.ne.s32.totalorder %s64, %s65
      %p77 = scmp.eq.s32.totalorder %s20, 1
      %p78 = por %p76, %p77
      %p80 = scmp.ne.s32.totalorder %s65, %s79
      %p81 = scmp.eq.s32.totalorder %s20, 0
      %p82 = por %p80, %p81
      %s84 = sadd.s32 %s83, 1
      %p87 = scmp.eq.s32.totalorder %s14, 1
      %p88 = scmp.ne.s32.totalorder %s83, %s85
      %p89 = scmp.eq.s32.totalorder %s14, 0
      %p90 = por %p88, %p89
      %p91 = scmp.ne.s32.totalorder %s83, %s85
      %p92 = scmp.eq.s32.totalorder %s19, 1
      %p93 = por %p91, %p92
      %p94 = scmp.ne.s32.totalorder %s85, %s86
      %p95 = scmp.eq.s32.totalorder %s19, 0
      %p96 = por %p94, %p95
      %p97 = scmp.ne.s32.totalorder %s85, %s86
      %p98 = scmp.eq.s32.totalorder %s20, 1
      %p99 = por %p97, %p98
      %p101 = scmp.ne.s32.totalorder %s86, %s100
      %p102 = scmp.eq.s32.totalorder %s20, 0
      %p103 = por %p101, %p102
      %s105 = sadd.s32 %s104, 1
      %p108 = scmp.eq.s32.totalorder %s14, 1
      %p109 = scmp.ne.s32.totalorder %s104, %s106
      %p110 = scmp.eq.s32.totalorder %s14, 0
      %p111 = por %p109, %p110
      %p112 = scmp.ne.s32.totalorder %s104, %s106
      %p113 = scmp.eq.s32.totalorder %s19, 1
      %p114 = por %p112, %p113
      %p115 = scmp.ne.s32.totalorder %s106, %s107
      %p116 = scmp.eq.s32.totalorder %s19, 0
      %p117 = por %p115, %p116
      %p118 = scmp.ne.s32.totalorder %s106, %s107
      %p119 = scmp.eq.s32.totalorder %s20, 1
      %p120 = por %p118, %p119
      %p122 = scmp.ne.s32.totalorder %s107, %s121
      %p123 = scmp.eq.s32.totalorder %s20, 0
      %p124 = por %p122, %p123
      %s126 = sadd.s32 %s125, 1
      %p129 = scmp.eq.s32.totalorder %s14, 1
      %p130 = scmp.ne.s32.totalorder %s125, %s127
      %p131 = scmp.eq.s32.totalorder %s14, 0
      %p132 = por %p130, %p131
      %p133 = scmp.ne.s32.totalorder %s125, %s127
      %p134 = scmp.eq.s32.totalorder %s19, 1
      %p135 = por %p133, %p134
      %p136 = scmp.ne.s32.totalorder %s127, %s128
      %p137 = scmp.eq.s32.totalorder %s19, 0
      %p138 = por %p136, %p137
      %p139 = scmp.ne.s32.totalorder %s127, %s128
      %p140 = scmp.eq.s32.totalorder %s20, 1
      %p141 = por %p139, %p140
      %p143 = scmp.ne.s32.totalorder %s128, %s142
      %p144 = scmp.eq.s32.totalorder %s20, 0
      %p145 = por %p143, %p144
      %s146 = ssub.s32 %s21, %s33
      %s147 = ssub.s32 %s22, %s29
      %s148 = sor.u32 %s146, %s147
      %p149 = scmp.eq.s32.totalorder %s148, 0
      %s151 = sadd.s32 %s150, 1
      %s152 = scalar_select %p149, %s150, %s151
      %p155 = pneg %p149
      %p156 = scmp.eq.s32.totalorder %s14, 1
      %p157 = por %p155, %p156
      %p158 = scmp.ne.s32.totalorder %s150, %s153
      %p159 = scmp.eq.s32.totalorder %s14, 0
      %p160 = por %p158, %p159
      %p161 = scmp.ne.s32.totalorder %s150, %s153
      %p162 = scmp.eq.s32.totalorder %s19, 1
      %p163 = por %p161, %p162
      %p164 = scmp.ne.s32.totalorder %s153, %s154
      %p165 = scmp.eq.s32.totalorder %s19, 0
      %p166 = por %p164, %p165
      %p167 = scmp.ne.s32.totalorder %s153, %s154
      %p168 = scmp.eq.s32.totalorder %s20, 1
      %p169 = por %p167, %p168
      %p171 = scmp.ne.s32.totalorder %s154, %s170
      %p172 = scmp.eq.s32.totalorder %s20, 0
      %p173 = por %p171, %p172
      %p174 = scmp.le.s32.totalorder 1, %s14
      %p175 = scmp.lt.s32.totalorder %s14, 3
      %p176 = pnand %p174, %p175
      %p177 = pneg %p176
      // Predicated region
      $region9: #{tpu_custom_call.1} parent=5 // pred_check
        _
      $region10: #{tpu_custom_call.1} parent=5 // pred_check_branch
        %179 = sbr.rel (%p176) target = $region12
      $region11: #{tpu_custom_call.1} parent=5 // pred_region
        %s180 = ssub.s32 %s14, 1
        // Predicated region
        $region13: #{tpu_custom_call.1} parent=11 // pred_check
          %p181 = pneg %p75
        $region14: #{tpu_custom_call.1} parent=11 // pred_check_branch
          %183 = sbr.rel (%p181) target = $region16
        $region15: #{tpu_custom_call.1} parent=11 // pred_region
          _
        $region16: #{tpu_custom_call.1} parent=11 // pred_fallthru
          _
        // Predicated region
        $region17: #{tpu_custom_call.1} parent=11 // pred_check
          %p184 = pneg %p96
        $region18: #{tpu_custom_call.1} parent=11 // pred_check_branch
          %186 = sbr.rel (%p184) target = $region20
        $region19: #{tpu_custom_call.1} parent=11 // pred_region
          _
        $region20: #{tpu_custom_call.1} parent=11 // pred_fallthru
          _
        // Predicated region
        $region21: #{tpu_custom_call.1} parent=11 // pred_check
          %p187 = pneg %p117
        $region22: #{tpu_custom_call.1} parent=11 // pred_check_branch
          %189 = sbr.rel (%p187) target = $region24
        $region23: #{tpu_custom_call.1} parent=11 // pred_region
          _
        $region24: #{tpu_custom_call.1} parent=11 // pred_fallthru
          _
        // Predicated region
        $region25: #{tpu_custom_call.1} parent=11 // pred_check
          %p190 = pneg %p138
        $region26: #{tpu_custom_call.1} parent=11 // pred_check_branch
          %192 = sbr.rel (%p190) target = $region28
        $region27: #{tpu_custom_call.1} parent=11 // pred_region
          _
        $region28: #{tpu_custom_call.1} parent=11 // pred_fallthru
          _
      $region12: #{tpu_custom_call.1} parent=5 // pred_fallthru
        _
      %p193 = scmp.lt.s32.totalorder %s14, 2
      // Predicated region
      $region29: #{tpu_custom_call.1} parent=5 // pred_check
        %p194 = pneg %p193
      $region30: #{tpu_custom_call.1} parent=5 // pred_check_branch
        %196 = sbr.rel (%p194) target = $region32
      $region31: #{tpu_custom_call.1} parent=5 // pred_region
        // Predicated region
        $region33: #{tpu_custom_call.1} parent=31 // pred_check
          %p197 = pneg %p48
        $region34: #{tpu_custom_call.1} parent=31 // pred_check_branch
          %199 = sbr.rel (%p197) target = $region36
        $region35: #{tpu_custom_call.1} parent=31 // pred_region
          %s200 = smul.u32 2, %s22
          %p201 = scmp.lt.s32.totalorder %s21, 1
          %s202 = scalar_select %p201, %s21, 1
          %p203 = scmp.lt.s32.totalorder %s200, 1
          %s204 = scalar_select %p203, %s200, 1
          %s205 = smul.addr %s202, 2
          %s206 = sadd.s32 %s204, %s205
          %s207 = smul.addr %s206, 2
          %s208 = scalar_lea.vmem %s0, %s207
          %s209 = smul.u32 2, %s22
        $region36: #{tpu_custom_call.1} parent=31 // pred_fallthru
          _
      $region32: #{tpu_custom_call.1} parent=5 // pred_fallthru
        _
      %p210 = scmp.le.s32.totalorder 1, %s14
      %p211 = scmp.lt.s32.totalorder %s14, 3
      %p212 = pnand %p210, %p211
      %p213 = pneg %p212
      // Predicated region
      $region37: #{tpu_custom_call.1} parent=5 // pred_check
        _
      $region38: #{tpu_custom_call.1} parent=5 // pred_check_branch
        %215 = sbr.rel (%p212) target = $region40
      $region39: #{tpu_custom_call.1} parent=5 // pred_region
        %s216 = ssub.s32 %s14, 1
        %s217 = smul.u32 2, %s24
        %p218 = scmp.lt.s32.totalorder %s23, 1
        %s219 = scalar_select %p218, %s23, 1
        %p220 = scmp.lt.s32.totalorder %s217, 1
        %s221 = scalar_select %p220, %s217, 1
        %s222 = smul.addr %s219, 2
        %s223 = sadd.s32 %s221, %s222
        %s224 = smul.addr %s223, 2
        %s225 = scalar_lea.vmem %s0, %s224
        %p226 = pneg %p54
        %p227 = pneg %p51
        %p228 = pneg %p75
        %p229 = pneg %p72
        %p230 = pneg %p96
        %p231 = pneg %p93
        %p232 = pneg %p117
        %p233 = pneg %p114
        %p234 = pneg %p138
        %p235 = pneg %p135
        %p236 = pneg %p166
        %p237 = pneg %p163
        %s238 = sand.u32 %s153, 1
        %s239 = scalar_lea.sflag [#allocation4], %s238
        %s240 = sand.u32 %s153, 1
        %s241 = smul.addr %s240, 8
        %s242 = scalar_lea.vmem [#allocation3], %s241
        %s243 = smul.u32 2, %s24
        %p244 = scmp.lt.s32.totalorder %s23, 1
        %s245 = scalar_select %p244, %s23, 1
        %p246 = scmp.lt.s32.totalorder %s243, 1
        %s247 = scalar_select %p246, %s243, 1
        %s248 = smul.addr %s245, 2
        %s249 = sadd.s32 %s247, %s248
        %s250 = smul.addr %s249, 2
        %s251 = scalar_lea.vmem %s0, %s250
        %s252 = smul.u32 2, %s24
        %s253 = smul.u32 2, %s24
        %v254 = vld [vmem:[%s251] sm:$0xf]
        %v255 = vld [vmem:[%s1] sm:$0xff]
        %v256 = vld [vmem:[%s1 + $0x8] sm:$0xff]
        %v257 = vld [vmem:[%s1 + $0x10] sm:$0xff]
        %v258 = vld [vmem:[%s1 + $0x18] sm:$0xff]
        %v259 = vld [vmem:[%s2] sm:$0xff]
        %v260 = vld [vmem:[%s2 + $0x8] sm:$0xff]
        %v261 = vld [vmem:[%s2 + $0x10] sm:$0xff]
        %v262 = vld [vmem:[%s2 + $0x18] sm:$0xff]
        %264 = vset.pattern.permute.xlu0 0
        %265 = vperm.xlu0 %264, %v259
        %v266 = vpop.permute.xlu0 %265
        %269 = vset.pattern.permute.xlu0 0
        %270 = vperm.xlu0 %269, %v260
        %v271 = vpop.permute.xlu0 %270
        %274 = vset.pattern.permute.xlu0 0
        %275 = vperm.xlu0 %274, %v261
        %v276 = vpop.permute.xlu0 %275
        %279 = vset.pattern.permute.xlu0 0
        %280 = vperm.xlu0 %279, %v262
        %v281 = vpop.permute.xlu0 %280
        %v285 = vunpack.c.l.s4 1983009808
        %v286 = vunpack.c.0.s8 %v285
        %v287 = vlaneseq
        %v288 = vshrl.u32 %v287, 7
        %v289 = vsub.s32 %v286, %v288
        %v290 = vrot.slane %v254, %v289
        %v291 = vcombine.high %v290, %v290
        %vm292 = vcmask 15360
        %v294 = vsel %vm292, %v255, 0
        %v297 = vsel %vm292, %v256, 0
        %v300 = vsel %vm292, %v257, 0
        %v303 = vsel %vm292, %v258, 0
        %vm305 = vcmask 1041408
        %v306 = vsel %vm305, %v290, 0
        %v308 = vsel %vm305, %v291, 0
        %310 = vmatprep.subr.mxu0 0.0
        %311 = vmatpush1.msra.mxu0 0.0
        %312 = vmatprep.subr.mxu0 0.0
        %313 = vmatpush1.msra.mxu0 0.0
        %314 = vmatprep.subr.mxu0 0.0
        %315 = vmatpush1.msra.mxu0 0.0
        %316 = vmatprep.subr.mxu0 0.0
        %317 = vmatpush1.msra.mxu0 0.0
        %318 = vmatprep.subr.mxu0 0.0
        %319 = vmatpush1.msra.mxu0 0.0
        %320 = vmatprep.subr.mxu0 0.0
        %321 = vmatpush1.msra.mxu0 0.0
        %322 = vmatprep.subr.mxu0 0.0
        %323 = vmatpush1.msra.mxu0 0.0
        %324 = vmatprep.subr.mxu0 0.0
        %325 = vmatpush1.msra.mxu0 0.0
        %326 = vmatprep.subr.mxu0 0.0
        %327 = vmatpush1.msra.mxu0 0.0
        %328 = vmatprep.subr.mxu0 0.0
        %329 = vmatpush1.msra.mxu0 0.0
        %330 = vmatprep.subr.mxu0 0.0
        %331 = vmatpush1.msra.mxu0 0.0
        %332 = vmatprep.subr.mxu0 0.0
        %333 = vmatpush1.msra.mxu0 0.0
        %334 = vmatprep.subr.mxu0 0.0
        %335 = vmatpush1.msra.mxu0 0.0
        %336 = vmatprep.subr.mxu0 0.0
        %337 = vmatpush1.msra.mxu0 0.0
        %338 = vmatprep.subr.mxu0 0.0
        %339 = vmatpush1.msra.mxu0 0.0
        %340 = vmatprep.subr.mxu0 %v308
        %341 = vmatpush1.msra.mxu0 %v306
        %342 = vmatprep.subr.mxu0 0.0
        %343 = vmatpush2.msra.mxu0 0.0
        %344 = vmatprep.subr.mxu0 0.0
        %345 = vmatpush2.msra.mxu0 0.0
        %346 = vmatprep.subr.mxu0 0.0
        %347 = vmatpush2.msra.mxu0 0.0
        %348 = vmatprep.subr.mxu0 0.0
        %349 = vmatpush2.msra.mxu0 0.0
        %350 = vmatprep.subr.mxu0 0.0
        %351 = vmatpush2.msra.mxu0 0.0
        %352 = vmatprep.subr.mxu0 0.0
        %353 = vmatpush2.msra.mxu0 0.0
        %354 = vmatprep.subr.mxu0 0.0
        %355 = vmatpush2.msra.mxu0 0.0
        %356 = vmatprep.subr.mxu0 0.0
        %357 = vmatpush2.msra.mxu0 0.0
        %358 = vmatprep.subr.mxu0 0.0
        %359 = vmatpush2.msra.mxu0 0.0
        %360 = vmatprep.subr.mxu0 0.0
        %361 = vmatpush2.msra.mxu0 0.0
        %362 = vmatprep.subr.mxu0 0.0
        %363 = vmatpush2.msra.mxu0 0.0
        %364 = vmatprep.subr.mxu0 0.0
        %365 = vmatpush2.msra.mxu0 0.0
        %366 = vmatprep.subr.mxu0 0.0
        %367 = vmatpush2.msra.mxu0 0.0
        %368 = vmatprep.subr.mxu0 0.0
        %369 = vmatpush2.msra.mxu0 0.0
        %370 = vmatprep.subr.mxu0 0.0
        %371 = vmatpush2.msra.mxu0 0.0
        %372 = vmatprep.subr.mxu0 0.0
        %373 = vmatpush2.msra.mxu0 0.0
        %374 = vmatprep.mubr.f32.mxu0 0.0
        %375 = vmatmul.mubr.f32.gmra.mxu0 %v294
        %v376 = vpop.f32.mrf.mxu0
        %v377 = vadd.f32 %v266, %v376
        %v378 = vpop.f32.mrf.mxu0
        %v379 = vadd.f32 %v266, %v378
        %380 = vmatprep.mubr.f32.mxu0 0.0
        %381 = vmatmul.mubr.f32.gmra.mxu0 %v297
        %v382 = vpop.f32.mrf.mxu0
        %v383 = vadd.f32 %v271, %v382
        %v384 = vpop.f32.mrf.mxu0
        %v385 = vadd.f32 %v271, %v384
        %386 = vmatprep.mubr.f32.mxu0 0.0
        %387 = vmatmul.mubr.f32.gmra.mxu0 %v300
        %v388 = vpop.f32.mrf.mxu0
        %v389 = vadd.f32 %v276, %v388
        %v390 = vpop.f32.mrf.mxu0
        %v391 = vadd.f32 %v276, %v390
        %392 = vmatprep.mubr.f32.mxu0 0.0
        %393 = vmatmul.mubr.f32.gmra.mxu0 %v303
        %v394 = vpop.f32.mrf.mxu0
        %v395 = vadd.f32 %v281, %v394
        %v396 = vpop.f32.mrf.mxu0
        %v397 = vadd.f32 %v281, %v396
        %398 = vdwg.mxu0
        %v399 = vtanh.pop %v377
        %v400 = vtanh.pop %v379
        %v401 = vtanh.pop %v383
        %v402 = vtanh.pop %v385
        %v403 = vtanh.pop %v389
        %v404 = vtanh.pop %v391
        %v405 = vtanh.pop %v395
        %v406 = vtanh.pop %v397
        %407 = vst [vmem:[#allocation2 + $0x40] sm:$0xff] %v399
        %408 = vst [vmem:[#allocation2 + $0x48] sm:$0xff] %v400
        %409 = vst [vmem:[#allocation2 + $0x50] sm:$0xff] %v401
        %410 = vst [vmem:[#allocation2 + $0x58] sm:$0xff] %v402
        %411 = vst [vmem:[#allocation2 + $0x60] sm:$0xff] %v403
        %412 = vst [vmem:[#allocation2 + $0x68] sm:$0xff] %v404
        %413 = vst [vmem:[#allocation2 + $0x70] sm:$0xff] %v405
        %414 = vst [vmem:[#allocation2 + $0x78] sm:$0xff] %v406
        %v415 = vmul.f32 %v399, %v399
        %v416 = vmul.f32 %v400, %v400
        %v417 = vmul.f32 %v401, %v401
        %v418 = vmul.f32 %v402, %v402
        %v419 = vmul.f32 %v403, %v403
        %v420 = vmul.f32 %v404, %v404
        %v421 = vmul.f32 %v405, %v405
        %v422 = vmul.f32 %v406, %v406
        %v423 = vmul.f32 %v415, %v399
        %v424 = vmul.f32 %v416, %v400
        %v425 = vmul.f32 %v417, %v401
        %v426 = vmul.f32 %v418, %v402
        %v427 = vmul.f32 %v419, %v403
        %v428 = vmul.f32 %v420, %v404
        %v429 = vmul.f32 %v421, %v405
        %v430 = vmul.f32 %v422, %v406
        %v431 = vsub.f32 %v399, %v423
        %v432 = vsub.f32 %v400, %v424
        %v433 = vsub.f32 %v401, %v425
        %v434 = vsub.f32 %v402, %v426
        %v435 = vsub.f32 %v403, %v427
        %v436 = vsub.f32 %v404, %v428
        %v437 = vsub.f32 %v405, %v429
        %v438 = vsub.f32 %v406, %v430
        %439 = vst [vmem:[#allocation2] sm:$0xff] %v431
        %440 = vst [vmem:[#allocation2 + $0x8] sm:$0xff] %v432
        %441 = vst [vmem:[#allocation2 + $0x10] sm:$0xff] %v433
        %442 = vst [vmem:[#allocation2 + $0x18] sm:$0xff] %v434
        %443 = vst [vmem:[#allocation2 + $0x20] sm:$0xff] %v435
        %444 = vst [vmem:[#allocation2 + $0x28] sm:$0xff] %v436
        %445 = vst [vmem:[#allocation2 + $0x30] sm:$0xff] %v437
        %446 = vst [vmem:[#allocation2 + $0x38] sm:$0xff] %v438
        %v447 = vld [vmem:[%s3] sm:$0xf]
        %v448 = vld [vmem:[#allocation2] sm:$0xff]
        %v449 = vld [vmem:[#allocation2 + $0x8] sm:$0xff]
        %v450 = vld [vmem:[#allocation2 + $0x10] sm:$0xff]
        %v451 = vld [vmem:[#allocation2 + $0x18] sm:$0xff]
        %v452 = vld [vmem:[#allocation2 + $0x20] sm:$0xff]
        %v453 = vld [vmem:[#allocation2 + $0x28] sm:$0xff]
        %v454 = vld [vmem:[#allocation2 + $0x30] sm:$0xff]
        %v455 = vld [vmem:[#allocation2 + $0x38] sm:$0xff]
        %v456 = vld [vmem:[#allocation2 + $0x40] sm:$0xff]
        %v457 = vld [vmem:[#allocation2 + $0x48] sm:$0xff]
        %v458 = vld [vmem:[#allocation2 + $0x50] sm:$0xff]
        %v459 = vld [vmem:[#allocation2 + $0x58] sm:$0xff]
        %v460 = vld [vmem:[#allocation2 + $0x60] sm:$0xff]
        %v461 = vld [vmem:[#allocation2 + $0x68] sm:$0xff]
        %v462 = vld [vmem:[#allocation2 + $0x70] sm:$0xff]
        %v463 = vld [vmem:[#allocation2 + $0x78] sm:$0xff]
        %v464 = vld [vmem:[%s4] sm:$0xf]
        %466 = vset.pattern.permute.xlu0 0
        %467 = vperm.xlu0 %466, %v464
        %v468 = vpop.permute.xlu0 %467
        %vm470 = vcmask 523264
        %v472 = vsel %vm470, %v447, 0
        %474 = vmatprep.subr.mxu0 0.0
        %475 = vmatpush1.msra.mxu0 0.0
        %476 = vmatprep.subr.mxu0 0.0
        %477 = vmatpush1.msra.mxu0 0.0
        %478 = vmatprep.subr.mxu0 0.0
        %479 = vmatpush1.msra.mxu0 0.0
        %480 = vmatprep.subr.mxu0 0.0
        %481 = vmatpush1.msra.mxu0 0.0
        %482 = vmatprep.subr.mxu0 0.0
        %483 = vmatpush1.msra.mxu0 0.0
        %484 = vmatprep.subr.mxu0 0.0
        %485 = vmatpush1.msra.mxu0 0.0
        %486 = vmatprep.subr.mxu0 0.0
        %487 = vmatpush1.msra.mxu0 0.0
        %488 = vmatprep.subr.mxu0 0.0
        %489 = vmatpush1.msra.mxu0 0.0
        %490 = vmatprep.subr.mxu0 %v463
        %491 = vmatpush1.msra.mxu0 %v462
        %492 = vmatprep.subr.mxu0 %v461
        %493 = vmatpush1.msra.mxu0 %v460
        %494 = vmatprep.subr.mxu0 %v459
        %495 = vmatpush1.msra.mxu0 %v458
        %496 = vmatprep.subr.mxu0 %v457
        %497 = vmatpush1.msra.mxu0 %v456
        %498 = vmatprep.subr.mxu0 %v455
        %499 = vmatpush1.msra.mxu0 %v454
        %500 = vmatprep.subr.mxu0 %v453
        %501 = vmatpush1.msra.mxu0 %v452
        %502 = vmatprep.subr.mxu0 %v451
        %503 = vmatpush1.msra.mxu0 %v450
        %504 = vmatprep.subr.mxu0 %v449
        %505 = vmatpush1.msra.mxu0 %v448
        %506 = vmatprep.subr.mxu0 0.0
        %507 = vmatpush2.msra.mxu0 0.0
        %508 = vmatprep.subr.mxu0 0.0
        %509 = vmatpush2.msra.mxu0 0.0
        %510 = vmatprep.subr.mxu0 0.0
        %511 = vmatpush2.msra.mxu0 0.0
        %512 = vmatprep.subr.mxu0 0.0
        %513 = vmatpush2.msra.mxu0 0.0
        %514 = vmatprep.subr.mxu0 0.0
        %515 = vmatpush2.msra.mxu0 0.0
        %516 = vmatprep.subr.mxu0 0.0
        %517 = vmatpush2.msra.mxu0 0.0
        %518 = vmatprep.subr.mxu0 0.0
        %519 = vmatpush2.msra.mxu0 0.0
        %520 = vmatprep.subr.mxu0 0.0
        %521 = vmatpush2.msra.mxu0 0.0
        %522 = vmatprep.subr.mxu0 0.0
        %523 = vmatpush2.msra.mxu0 0.0
        %524 = vmatprep.subr.mxu0 0.0
        %525 = vmatpush2.msra.mxu0 0.0
        %526 = vmatprep.subr.mxu0 0.0
        %527 = vmatpush2.msra.mxu0 0.0
        %528 = vmatprep.subr.mxu0 0.0
        %529 = vmatpush2.msra.mxu0 0.0
        %530 = vmatprep.subr.mxu0 0.0
        %531 = vmatpush2.msra.mxu0 0.0
        %532 = vmatprep.subr.mxu0 0.0
        %533 = vmatpush2.msra.mxu0 0.0
        %534 = vmatprep.subr.mxu0 0.0
        %535 = vmatpush2.msra.mxu0 0.0
        %536 = vmatprep.subr.mxu0 0.0
        %537 = vmatpush2.msra.mxu0 0.0
        %538 = vmatprep.mubr.f32.mxu0 0.0
        %539 = vmatmul.mubr.f32.gmra.mxu0 %v472
        %v540 = vpop.f32.mrf.mxu0
        %v541 = vadd.f32 %v468, %v540
        %v542 = vpop.f32.mrf.mxu0
        %v543 = vadd.f32 %v468, %v542
        %544 = vdwg.mxu0
        %v547 = vcombine.low %v541, %v543
        %549 = vst [vmem:[%s242] sm:$0xff] %v547
        %s550 = sand.u32 %s153, 1
        %s551 = scalar_lea.sflag [#allocation4], %s550
        %s552 = sand.u32 %s153, 1
        %s553 = smul.addr %s552, 8
        %s554 = scalar_lea.vmem [#allocation3], %s553
        // Predicated region
        $region41: #{tpu_custom_call.1} parent=39 // pred_check
          %p555 = pneg %p163
        $region42: #{tpu_custom_call.1} parent=39 // pred_check_branch
          %557 = sbr.rel (%p555) target = $region44
        $region43: #{tpu_custom_call.1} parent=39 // pred_region
          %s558 = smul.u32 2, %s24
          %s560 = ssub.s32 128, 128
          %561 = vsyncadd %s551, %s560
          %s562 = smul.addr %s23, 2
          %s563 = sadd.s32 %s558, %s562
          %s564 = smul.addr %s563, 64
          %s565 = scalar_lea.hbm %s5, %s564
          %s567 = sshll.u32 %s554, 4
          %s568 = int_to_ptr.vmem [resolvable:$true] %s567
          %570 = dma.vmem_to_hbm [thread:$0]  %s568, 128, %s565, %s551
        $region44: #{tpu_custom_call.1} parent=39 // pred_fallthru
          _
      $region40: #{tpu_custom_call.1} parent=5 // pred_fallthru
        _
      %p571 = scmp.le.s32.totalorder 2, %s14
      // Predicated region
      $region45: #{tpu_custom_call.1} parent=5 // pred_check
        %p572 = pneg %p571
      $region46: #{tpu_custom_call.1} parent=5 // pred_check_branch
        %574 = sbr.rel (%p572) target = $region48
      $region47: #{tpu_custom_call.1} parent=5 // pred_region
        %s575 = ssub.s32 %s14, 2
        // Predicated region
        $region49: #{tpu_custom_call.1} parent=47 // pred_check
          %p576 = pneg %p169
        $region50: #{tpu_custom_call.1} parent=47 // pred_check_branch
          %578 = sbr.rel (%p576) target = $region52
        $region51: #{tpu_custom_call.1} parent=47 // pred_region
          %s579 = sand.u32 %s154, 1
          %s580 = scalar_lea.sflag [#allocation4], %s579
          %s581 = sand.u32 %s154, 1
          %s582 = smul.addr %s581, 8
          %s583 = scalar_lea.vmem [#allocation3], %s582
          %584 = dma.done %s580, 128
        $region52: #{tpu_custom_call.1} parent=47 // pred_fallthru
          _
      $region48: #{tpu_custom_call.1} parent=5 // pred_fallthru
        _
    $region6: #{tpu_custom_call.1} parent=1 // loop_footer
      %s18 = sadd.s32 1, %s14
    $region7: #{tpu_custom_call.1} parent=1 // loop_footer_branch
      %13 = sbr.rel target = $region3
    $region8: #{tpu_custom_call.1} parent=1 // loop_exit
      _
    %585 = vsyncpa [#allocation4], 1
    %s586 = scalar_lea.sflag [#allocation4], 1
    %587 = vsyncpa %s586, 1

</llo_original>
